<compile_context>
chip_gen: v7x
topology: tpu7x:2x2x1
jax: 0.10.0
libtpu: 0.0.40
codegen_flags: <defaults>
</compile_context>

<pallas_src>
import math

import jax
import jax.numpy as jnp
from jax.experimental import pallas as pl
from jax.experimental.pallas import tpu as pltpu


def _round_up(n, m):
    return (n + m - 1) // m * m


def _make_mlp_kernel(n_linear):
    """Kernel for `n_linear` chained Linear layers (ReLU between them)."""

    def kernel(*refs):
        x_ref = refs[0]
        o_ref = refs[-1]
        param_refs = refs[1:-1]  # (w0, b0, w1, b1, ...)

        h = x_ref[...]                                   # bf16 (tm, latent)
        acc = None
        for li in range(n_linear):
            w = param_refs[2 * li][...]                  # bf16 (d_in, d_out)
            b = param_refs[2 * li + 1][...]              # f32  (1, d_out)
            acc = jnp.dot(h, w, preferred_element_type=jnp.float32) + b
            if li < n_linear - 1:                        # ReLU on all but last
                h = jnp.maximum(acc, 0.0).astype(jnp.bfloat16)
        o_ref[...] = acc.astype(o_ref.dtype)             # lane-dense store

    return kernel


def _xla_reference_path(x, weights, biases):
    h = x
    for i, (w, b) in enumerate(zip(weights, biases)):
        h = jnp.dot(h, w) + b[0]
        if i < len(weights) - 1:
            h = jnp.maximum(h, 0.0)
    return h


def decoder_mlp_forward(x, weights, biases, *, tm=2048, min_rows_for_pallas=1024):
    """x: (..., latent_dim); weights[i]: (d_in, d_out); biases[i]: (1, d_out)."""
    orig_dtype = x.dtype
    orig_lead = x.shape[:-1]
    latent_dim = x.shape[-1]
    input_dim = weights[-1].shape[1]
    n_linear = len(weights)

    M = int(math.prod(orig_lead)) if orig_lead else 1

    # Tiny problems: XLA fusion beats a single-step pallas_call.
    if M < min_rows_for_pallas:
        out = _xla_reference_path(x.reshape(M, latent_dim), weights, biases)
        return out.astype(orig_dtype).reshape(*orig_lead, input_dim)

    LANE = 128
    ROW_ALIGN = 16                      # bf16 packs 2 rows per sublane
    out_dim_p = _round_up(input_dim, LANE)   # lane-dense (unmasked) output

    # bf16 weights / activations; biases stay f32 (f32 accumulate + add).
    ws = [w.astype(jnp.bfloat16) for w in weights]
    bs = [b.astype(jnp.float32) for b in biases]
    if out_dim_p != input_dim:
        ws[-1] = jnp.pad(ws[-1], ((0, 0), (0, out_dim_p - input_dim)))
        bs[-1] = jnp.pad(bs[-1], ((0, 0), (0, out_dim_p - input_dim)))

    xm = x.reshape(M, latent_dim).astype(jnp.bfloat16)

    # Row tiling: big tiles amortize per-step overhead, but keep >= 2 grid
    # steps when possible so v7x can shard the parallel axis over both TCs.
    if M > 2 * ROW_ALIGN:
        tm_eff = min(max(tm, ROW_ALIGN), _round_up((M + 1) // 2, ROW_ALIGN))
    else:
        tm_eff = _round_up(max(M, 1), ROW_ALIGN)
    m_padded = _round_up(M, tm_eff)
    if m_padded != M:
        xm = jnp.pad(xm, ((0, m_padded - M), (0, 0)))
    grid = (m_padded // tm_eff,)

    # Specs: x/out tiled over rows; parameters VMEM-resident (DMA'd once).
    in_specs = [pl.BlockSpec((tm_eff, latent_dim), lambda i: (i, 0))]
    params = []
    for w, b in zip(ws, bs):
        in_specs.append(pl.BlockSpec(w.shape, lambda i: (0, 0)))
        in_specs.append(pl.BlockSpec(b.shape, lambda i: (0, 0)))
        params += [w, b]
    out_specs = pl.BlockSpec((tm_eff, out_dim_p), lambda i: (i, 0))

    # Cost estimate with the actual dtypes / padded dims.
    dims = [latent_dim] + [w.shape[1] for w in ws]
    out_itemsize = jnp.dtype(orig_dtype).itemsize
    flops = sum(2 * m_padded * a * b_ for a, b_ in zip(dims[:-1], dims[1:]))
    param_bytes = sum(w.size * 2 for w in ws) + sum(b.size * 4 for b in bs)
    bytes_accessed = xm.size * 2 + m_padded * out_dim_p * out_itemsize + param_bytes

    # VMEM budget from the actual footprint (double-buffered tiles + resident
    # params + live intermediates), not a blanket 48 MiB.
    max_w = max(dims)
    footprint = (2 * tm_eff * latent_dim * 2
                 + 2 * tm_eff * out_dim_p * out_itemsize
                 + 2 * param_bytes
                 + 4 * tm_eff * max_w * 4)
    vmem_limit = int(min(max(2 * footprint, 12 << 20), 32 << 20))

    out = pl.pallas_call(
        _make_mlp_kernel(n_linear),
        out_shape=jax.ShapeDtypeStruct((m_padded, out_dim_p), orig_dtype),
        grid=grid,
        in_specs=in_specs,
        out_specs=out_specs,
        compiler_params=pltpu.CompilerParams(
            dimension_semantics=("parallel",),
            vmem_limit_bytes=vmem_limit,
        ),
        cost_estimate=pl.CostEstimate(
            flops=flops, transcendentals=0, bytes_accessed=int(bytes_accessed)),
    )(xm, *params)

    out = out[:M, :input_dim]
    return out.reshape(*orig_lead, input_dim)


def _reference(x, weights, biases):
    h = x
    for i, (w, b) in enumerate(zip(weights, biases)):
        h = jnp.dot(h, w) + b[0]
        if i < len(weights) - 1:
            h = jnp.maximum(h, 0.0)
    return h


if __name__ == "__main__":
    # Module-consistent dims: latent=32, hidden=64, input=16, n_layers=3
    # -> 4 Linear layers total (latent -> hidden -> hidden -> hidden -> input).
    latent_dim, hidden_dim, input_dim = 32, 64, 16
    n_layers = 3
    dims = [latent_dim] + [hidden_dim] * n_layers + [input_dim]
    n_linear = len(dims) - 1

    key = jax.random.PRNGKey(0)
    keys = jax.random.split(key, 2 + 2 * n_linear)

    # Small spec-consistent input (batch=2, seq=8) and a larger one (M=4096)
    # that exercises the multi-step (>=2) grid / megacore path.
    x_small = jax.random.normal(keys[0], (2, 8, latent_dim), dtype=jnp.float32)
    x_large = jax.random.normal(keys[1], (8, 512, latent_dim), dtype=jnp.float32)

    # nn.Linear-style init: uniform(+-1/sqrt(fan_in)); weights stored (in, out).
    weights, biases = [], []
    for li, (d_in, d_out) in enumerate(zip(dims[:-1], dims[1:])):
        kw, kb = keys[2 + 2 * li], keys[3 + 2 * li]
        bound = 1.0 / math.sqrt(d_in)
        weights.append(jax.random.uniform(kw, (d_in, d_out), jnp.float32, -bound, bound))
        biases.append(jax.random.uniform(kb, (1, d_out), jnp.float32, -bound, bound))

    # min_rows_for_pallas=1 forces the Pallas path even at M=16 so the kernel
    # itself is exercised; the large case uses the default dispatch.
    y_small = decoder_mlp_forward(x_small, weights, biases, min_rows_for_pallas=1)
    y_large = decoder_mlp_forward(x_large, weights, biases)
    jax.block_until_ready((y_small, y_large))

    ref_small = _reference(x_small, weights, biases)
    ref_large = _reference(x_large, weights, biases)

    assert y_small.shape == (2, 8, input_dim), y_small.shape
    assert y_large.shape == (8, 512, input_dim), y_large.shape
    # bf16-class MXU accuracy (same class as default-precision f32 dots).
    assert jnp.allclose(y_small, ref_small, atol=3e-2, rtol=3e-2), float(
        jnp.max(jnp.abs(y_small - ref_small)))
    assert jnp.allclose(y_large, ref_large, atol=3e-2, rtol=3e-2), float(
        jnp.max(jnp.abs(y_large - ref_large)))

    print("KERNEL_OK")
</pallas_src>

<mosaic_0001>
module attributes {stable_mosaic.version = 11 : i64} {
  func.func @kernel(%arg0: i32, %arg1: memref<16x32xbf16, #tpu.memory_space<vmem>>, %arg2: memref<32x64xbf16, #tpu.memory_space<vmem>>, %arg3: memref<1x64xf32, #tpu.memory_space<vmem>>, %arg4: memref<64x64xbf16, #tpu.memory_space<vmem>>, %arg5: memref<1x64xf32, #tpu.memory_space<vmem>>, %arg6: memref<64x64xbf16, #tpu.memory_space<vmem>>, %arg7: memref<1x64xf32, #tpu.memory_space<vmem>>, %arg8: memref<64x128xbf16, #tpu.memory_space<vmem>>, %arg9: memref<1x128xf32, #tpu.memory_space<vmem>>, %arg10: memref<16x128xf32, #tpu.memory_space<vmem>>) attributes {dimension_semantics = [#tpu.dimension_semantics<parallel>], iteration_bounds = array<i64: 1>, scalar_prefetch = 0 : i64, scratch_operands = 0 : i64, tpu.core_type = #tpu.core_type<tc>, window_params = [{transform_indices = @transform_0, window_bounds = array<i64: 16, 32>}, {pipeline_mode = #tpu.pipeline_mode<synchronous>, transform_indices = @transform_1, window_bounds = array<i64: 32, 64>}, {pipeline_mode = #tpu.pipeline_mode<synchronous>, transform_indices = @transform_2, window_bounds = array<i64: 1, 64>}, {pipeline_mode = #tpu.pipeline_mode<synchronous>, transform_indices = @transform_3, window_bounds = array<i64: 64, 64>}, {pipeline_mode = #tpu.pipeline_mode<synchronous>, transform_indices = @transform_4, window_bounds = array<i64: 1, 64>}, {pipeline_mode = #tpu.pipeline_mode<synchronous>, transform_indices = @transform_5, window_bounds = array<i64: 64, 64>}, {pipeline_mode = #tpu.pipeline_mode<synchronous>, transform_indices = @transform_6, window_bounds = array<i64: 1, 64>}, {pipeline_mode = #tpu.pipeline_mode<synchronous>, transform_indices = @transform_7, window_bounds = array<i64: 64, 128>}, {pipeline_mode = #tpu.pipeline_mode<synchronous>, transform_indices = @transform_8, window_bounds = array<i64: 1, 128>}, {transform_indices = @transform_9, window_bounds = array<i64: 16, 128>}]} {
    %c0 = arith.constant 0 : index
    %c0_0 = arith.constant 0 : index
    %0 = vector.load %arg1[%c0, %c0_0] : memref<16x32xbf16, #tpu.memory_space<vmem>>, vector<16x32xbf16>
    %c0_1 = arith.constant 0 : index
    %c0_2 = arith.constant 0 : index
    %1 = vector.load %arg2[%c0_1, %c0_2] : memref<32x64xbf16, #tpu.memory_space<vmem>>, vector<32x64xbf16>
    %c0_3 = arith.constant 0 : index
    %c0_4 = arith.constant 0 : index
    %2 = vector.load %arg3[%c0_3, %c0_4] : memref<1x64xf32, #tpu.memory_space<vmem>>, vector<1x64xf32>
    %cst = arith.constant dense<0.000000e+00> : vector<16x64xf32>
    %3 = tpu.matmul %0, %1, %cst {dimension_numbers = #tpu.dot_dimension_numbers<[1], [0], [0], [1], [0, 0, 1, 1], [], []>} : vector<16x32xbf16>, vector<32x64xbf16>, vector<16x64xf32> -> vector<16x64xf32>
    %4 = vector.broadcast %2 : vector<1x64xf32> to vector<16x64xf32>
    %5 = arith.addf %3, %4 : vector<16x64xf32>
    %cst_5 = arith.constant 0.000000e+00 : f32
    %6 = vector.broadcast %cst_5 : f32 to vector<16x64xf32>
    %7 = arith.maximumf %5, %6 : vector<16x64xf32>
    %8 = arith.truncf %7 : vector<16x64xf32> to vector<16x64xbf16>
    %c0_6 = arith.constant 0 : index
    %c0_7 = arith.constant 0 : index
    %9 = vector.load %arg4[%c0_6, %c0_7] : memref<64x64xbf16, #tpu.memory_space<vmem>>, vector<64x64xbf16>
    %c0_8 = arith.constant 0 : index
    %c0_9 = arith.constant 0 : index
    %10 = vector.load %arg5[%c0_8, %c0_9] : memref<1x64xf32, #tpu.memory_space<vmem>>, vector<1x64xf32>
    %cst_10 = arith.constant dense<0.000000e+00> : vector<16x64xf32>
    %11 = tpu.matmul %8, %9, %cst_10 {dimension_numbers = #tpu.dot_dimension_numbers<[1], [0], [0], [1], [0, 0, 1, 1], [], []>} : vector<16x64xbf16>, vector<64x64xbf16>, vector<16x64xf32> -> vector<16x64xf32>
    %12 = vector.broadcast %10 : vector<1x64xf32> to vector<16x64xf32>
    %13 = arith.addf %11, %12 : vector<16x64xf32>
    %cst_11 = arith.constant 0.000000e+00 : f32
    %14 = vector.broadcast %cst_11 : f32 to vector<16x64xf32>
    %15 = arith.maximumf %13, %14 : vector<16x64xf32>
    %16 = arith.truncf %15 : vector<16x64xf32> to vector<16x64xbf16>
    %c0_12 = arith.constant 0 : index
    %c0_13 = arith.constant 0 : index
    %17 = vector.load %arg6[%c0_12, %c0_13] : memref<64x64xbf16, #tpu.memory_space<vmem>>, vector<64x64xbf16>
    %c0_14 = arith.constant 0 : index
    %c0_15 = arith.constant 0 : index
    %18 = vector.load %arg7[%c0_14, %c0_15] : memref<1x64xf32, #tpu.memory_space<vmem>>, vector<1x64xf32>
    %cst_16 = arith.constant dense<0.000000e+00> : vector<16x64xf32>
    %19 = tpu.matmul %16, %17, %cst_16 {dimension_numbers = #tpu.dot_dimension_numbers<[1], [0], [0], [1], [0, 0, 1, 1], [], []>} : vector<16x64xbf16>, vector<64x64xbf16>, vector<16x64xf32> -> vector<16x64xf32>
    %20 = vector.broadcast %18 : vector<1x64xf32> to vector<16x64xf32>
    %21 = arith.addf %19, %20 : vector<16x64xf32>
    %cst_17 = arith.constant 0.000000e+00 : f32
    %22 = vector.broadcast %cst_17 : f32 to vector<16x64xf32>
    %23 = arith.maximumf %21, %22 : vector<16x64xf32>
    %24 = arith.truncf %23 : vector<16x64xf32> to vector<16x64xbf16>
    %c0_18 = arith.constant 0 : index
    %c0_19 = arith.constant 0 : index
    %25 = vector.load %arg8[%c0_18, %c0_19] : memref<64x128xbf16, #tpu.memory_space<vmem>>, vector<64x128xbf16>
    %c0_20 = arith.constant 0 : index
    %c0_21 = arith.constant 0 : index
    %26 = vector.load %arg9[%c0_20, %c0_21] : memref<1x128xf32, #tpu.memory_space<vmem>>, vector<1x128xf32>
    %cst_22 = arith.constant dense<0.000000e+00> : vector<16x128xf32>
    %27 = tpu.matmul %24, %25, %cst_22 {dimension_numbers = #tpu.dot_dimension_numbers<[1], [0], [0], [1], [0, 0, 1, 1], [], []>} : vector<16x64xbf16>, vector<64x128xbf16>, vector<16x128xf32> -> vector<16x128xf32>
    %28 = vector.broadcast %26 : vector<1x128xf32> to vector<16x128xf32>
    %29 = arith.addf %27, %28 : vector<16x128xf32>
    %c0_23 = arith.constant 0 : index
    %c0_24 = arith.constant 0 : index
    %30 = vector.load %arg10[%c0_23, %c0_24] : memref<16x128xf32, #tpu.memory_space<vmem>>, vector<16x128xf32>
    tpu.vector_store %arg10[%c0_23, %c0_24], %29 {strides = array<i32>} : memref<16x128xf32, #tpu.memory_space<vmem>>, vector<16x128xf32>,
    return
  }
  func.func @transform_0(%arg0: i32) -> (i32, i32) {
    %c0_i32 = arith.constant 0 : i32
    %c0_i32_0 = arith.constant 0 : i32
    return %arg0, %c0_i32 : i32, i32
  }
  func.func @transform_1(%arg0: i32) -> (i32, i32) {
    %c0_i32 = arith.constant 0 : i32
    %c0_i32_0 = arith.constant 0 : i32
    %c0_i32_1 = arith.constant 0 : i32
    return %c0_i32, %c0_i32_0 : i32, i32
  }
  func.func @transform_2(%arg0: i32) -> (i32, i32) {
    %c0_i32 = arith.constant 0 : i32
    %c0_i32_0 = arith.constant 0 : i32
    %c0_i32_1 = arith.constant 0 : i32
    return %c0_i32, %c0_i32_0 : i32, i32
  }
  func.func @transform_3(%arg0: i32) -> (i32, i32) {
    %c0_i32 = arith.constant 0 : i32
    %c0_i32_0 = arith.constant 0 : i32
    %c0_i32_1 = arith.constant 0 : i32
    return %c0_i32, %c0_i32_0 : i32, i32
  }
  func.func @transform_4(%arg0: i32) -> (i32, i32) {
    %c0_i32 = arith.constant 0 : i32
    %c0_i32_0 = arith.constant 0 : i32
    %c0_i32_1 = arith.constant 0 : i32
    return %c0_i32, %c0_i32_0 : i32, i32
  }
  func.func @transform_5(%arg0: i32) -> (i32, i32) {
    %c0_i32 = arith.constant 0 : i32
    %c0_i32_0 = arith.constant 0 : i32
    %c0_i32_1 = arith.constant 0 : i32
    return %c0_i32, %c0_i32_0 : i32, i32
  }
  func.func @transform_6(%arg0: i32) -> (i32, i32) {
    %c0_i32 = arith.constant 0 : i32
    %c0_i32_0 = arith.constant 0 : i32
    %c0_i32_1 = arith.constant 0 : i32
    return %c0_i32, %c0_i32_0 : i32, i32
  }
  func.func @transform_7(%arg0: i32) -> (i32, i32) {
    %c0_i32 = arith.constant 0 : i32
    %c0_i32_0 = arith.constant 0 : i32
    %c0_i32_1 = arith.constant 0 : i32
    return %c0_i32, %c0_i32_0 : i32, i32
  }
  func.func @transform_8(%arg0: i32) -> (i32, i32) {
    %c0_i32 = arith.constant 0 : i32
    %c0_i32_0 = arith.constant 0 : i32
    %c0_i32_1 = arith.constant 0 : i32
    return %c0_i32, %c0_i32_0 : i32, i32
  }
  func.func @transform_9(%arg0: i32) -> (i32, i32) {
    %c0_i32 = arith.constant 0 : i32
    %c0_i32_0 = arith.constant 0 : i32
    return %arg0, %c0_i32 : i32, i32
  }
}

</mosaic_0001>

<llo_original>
// kernel: tpu_custom_call.1
$region0: #{tpu_custom_call.1}
  #allocation0 [shape = 'u32[]', space=smem, size = 0x4, offset = 0x4, fixed_abs, tag = 'smem constant byte address 0x4 - core index']
  #allocation1 [shape = 'u32[144,128]{1,0:T(1,128)}', space=vmem, size = 0x12000, scoped, tag = 'internal scratch']
  %s0 = inlined_call_operand.hbm [shape: bf16[16,32], index: 0, kind: input, shape index: {}]
  %s1 = inlined_call_operand.hbm [shape: bf16[32,64], index: 1, kind: input, shape index: {}]
  %s2 = inlined_call_operand.vmem [shape: f32[1,64], index: 2, kind: input, shape index: {}]
  %s3 = inlined_call_operand.hbm [shape: bf16[64,64], index: 3, kind: input, shape index: {}]
  %s4 = inlined_call_operand.vmem [shape: f32[1,64], index: 4, kind: input, shape index: {}]
  %s5 = inlined_call_operand.hbm [shape: bf16[64,64], index: 5, kind: input, shape index: {}]
  %s6 = inlined_call_operand.vmem [shape: f32[1,64], index: 6, kind: input, shape index: {}]
  %s7 = inlined_call_operand.hbm [shape: bf16[64,128], index: 7, kind: input, shape index: {}]
  %s8 = inlined_call_operand.vmem [shape: f32[1,128], index: 8, kind: input, shape index: {}]
  %s9 = inlined_call_operand.hbm [shape: f32[16,128], index: 9, kind: output, shape index: {}]
  %s10 = sld [smem:[#allocation0]]
  $region66: #{tpu_custom_call.1} parent=0
    _
  %s12 = ssub.s32 1, %s10
  %s13 = scalar_select 0, %s12, %s10
  $region1: #{tpu_custom_call.1} parent=0
    #allocation2 [shape = 'u8[4096]{0}', space=vmem, size = 0x1000, scoped, tag = 'input window, operand 0, single buffered']
    #allocation3 [shape = 's32[1]{0}', space=sflag, size = 0x4, scoped, tag = 'scoped memory for tpu_custom_call.1']
    #allocation4 [shape = 's32[1]{0}', space=sflag, size = 0x4, scoped, tag = 'scoped memory for tpu_custom_call.1']
    #allocation5 [shape = 'u8[8192]{0}', space=vmem, size = 0x2000, scoped, tag = 'input window, operand 1, single buffered']
    #allocation6 [shape = 's32[1]{0}', space=sflag, size = 0x4, scoped, tag = 'scoped memory for tpu_custom_call.1']
    #allocation7 [shape = 'u8[16384]{0}', space=vmem, size = 0x4000, scoped, tag = 'input window, operand 3, single buffered']
    #allocation8 [shape = 'u8[16384]{0}', space=vmem, size = 0x4000, scoped, tag = 'input window, operand 5, single buffered']
    #allocation9 [shape = 's32[1]{0}', space=sflag, size = 0x4, scoped, tag = 'scoped memory for tpu_custom_call.1']
    #allocation10 [shape = 'u8[16384]{0}', space=vmem, size = 0x4000, scoped, tag = 'input window, operand 7, single buffered']
    #allocation11 [shape = 'u8[8192]{0}', space=vmem, size = 0x2000, scoped, tag = 'output window, operand 0, single buffered']
    %14 = vsyncpa [#allocation3], 0
    %15 = vsyncpa [#allocation6], 0
    %16 = vsyncpa [#allocation9], 0
    %17 = vsyncpa [#allocation4], 0
    // Predicated region
    $region2: #{tpu_custom_call.1} parent=1 // pred_check
      _
    $region3: #{tpu_custom_call.1} parent=1 // pred_check_branch
      %19 = sbr.rel (0) target = $region5
    $region4: #{tpu_custom_call.1} parent=1 // pred_region
      %s21 = ssub.s32 128, 128
      %22 = vsyncadd [#allocation3], %s21
      %s23 = sshll.u32 [#allocation2], 4
      %s24 = int_to_ptr.vmem [resolvable:$true] %s23
      %29 = dma.hbm_to_vmem [thread:$0]  %s0, 128, %s24, [#allocation3], 64, 64, 4
    $region5: #{tpu_custom_call.1} parent=1 // pred_fallthru
      _
    // Predicated region
    $region6: #{tpu_custom_call.1} parent=1 // pred_check
      _
    $region7: #{tpu_custom_call.1} parent=1 // pred_check_branch
      %31 = sbr.rel (0) target = $region9
    $region8: #{tpu_custom_call.1} parent=1 // pred_region
      %s33 = ssub.s32 256, 256
      %34 = vsyncadd [#allocation6], %s33
      %s35 = sshll.u32 [#allocation5], 4
      %s36 = int_to_ptr.vmem [resolvable:$true] %s35
      %41 = dma.hbm_to_vmem [thread:$0]  %s1, 256, %s36, [#allocation6], 64, 64, 4
    $region9: #{tpu_custom_call.1} parent=1 // pred_fallthru
      _
    // Predicated region
    $region10: #{tpu_custom_call.1} parent=1 // pred_check
      _
    $region11: #{tpu_custom_call.1} parent=1 // pred_check_branch
      %43 = sbr.rel (0) target = $region13
    $region12: #{tpu_custom_call.1} parent=1 // pred_region
      _
    $region13: #{tpu_custom_call.1} parent=1 // pred_fallthru
      _
    // Predicated region
    $region14: #{tpu_custom_call.1} parent=1 // pred_check
      _
    $region15: #{tpu_custom_call.1} parent=1 // pred_check_branch
      %45 = sbr.rel (0) target = $region17
    $region16: #{tpu_custom_call.1} parent=1 // pred_region
      %s47 = ssub.s32 512, 512
      %48 = vsyncadd [#allocation6], %s47
      %s49 = sshll.u32 [#allocation7], 4
      %s50 = int_to_ptr.vmem [resolvable:$true] %s49
      %55 = dma.hbm_to_vmem [thread:$0]  %s3, 512, %s50, [#allocation6], 64, 64, 4
    $region17: #{tpu_custom_call.1} parent=1 // pred_fallthru
      _
    // Predicated region
    $region18: #{tpu_custom_call.1} parent=1 // pred_check
      _
    $region19: #{tpu_custom_call.1} parent=1 // pred_check_branch
      %57 = sbr.rel (0) target = $region21
    $region20: #{tpu_custom_call.1} parent=1 // pred_region
      _
    $region21: #{tpu_custom_call.1} parent=1 // pred_fallthru
      _
    // Predicated region
    $region22: #{tpu_custom_call.1} parent=1 // pred_check
      _
    $region23: #{tpu_custom_call.1} parent=1 // pred_check_branch
      %59 = sbr.rel (0) target = $region25
    $region24: #{tpu_custom_call.1} parent=1 // pred_region
      %s61 = ssub.s32 512, 512
      %62 = vsyncadd [#allocation9], %s61
      %s63 = sshll.u32 [#allocation8], 4
      %s64 = int_to_ptr.vmem [resolvable:$true] %s63
      %69 = dma.hbm_to_vmem [thread:$0]  %s5, 512, %s64, [#allocation9], 64, 64, 4
    $region25: #{tpu_custom_call.1} parent=1 // pred_fallthru
      _
    // Predicated region
    $region26: #{tpu_custom_call.1} parent=1 // pred_check
      _
    $region27: #{tpu_custom_call.1} parent=1 // pred_check_branch
      %71 = sbr.rel (0) target = $region29
    $region28: #{tpu_custom_call.1} parent=1 // pred_region
      _
    $region29: #{tpu_custom_call.1} parent=1 // pred_fallthru
      _
    // Predicated region
    $region30: #{tpu_custom_call.1} parent=1 // pred_check
      _
    $region31: #{tpu_custom_call.1} parent=1 // pred_check_branch
      %73 = sbr.rel (0) target = $region33
    $region32: #{tpu_custom_call.1} parent=1 // pred_region
      %s75 = ssub.s32 512, 512
      %76 = vsyncadd [#allocation9], %s75
      %s77 = sshll.u32 [#allocation10], 4
      %s78 = int_to_ptr.vmem [resolvable:$true] %s77
      %83 = dma.hbm_to_vmem [thread:$0]  %s7, 512, %s78, [#allocation9], 64, 64, 4
    $region33: #{tpu_custom_call.1} parent=1 // pred_fallthru
      _
    // Predicated region
    $region34: #{tpu_custom_call.1} parent=1 // pred_check
      _
    $region35: #{tpu_custom_call.1} parent=1 // pred_check_branch
      %85 = sbr.rel (0) target = $region37
    $region36: #{tpu_custom_call.1} parent=1 // pred_region
      _
    $region37: #{tpu_custom_call.1} parent=1 // pred_fallthru
      _
    // Predicated region
    $region38: #{tpu_custom_call.1} parent=1 // pred_check
      _
    $region39: #{tpu_custom_call.1} parent=1 // pred_check_branch
      %87 = sbr.rel (0) target = $region41
    $region40: #{tpu_custom_call.1} parent=1 // pred_region
      %88 = dma.done [#allocation3], 128
    $region41: #{tpu_custom_call.1} parent=1 // pred_fallthru
      _
    // Predicated region
    $region42: #{tpu_custom_call.1} parent=1 // pred_check
      _
    $region43: #{tpu_custom_call.1} parent=1 // pred_check_branch
      %90 = sbr.rel (0) target = $region45
    $region44: #{tpu_custom_call.1} parent=1 // pred_region
      %91 = dma.done [#allocation6], 256
    $region45: #{tpu_custom_call.1} parent=1 // pred_fallthru
      _
    // Predicated region
    $region46: #{tpu_custom_call.1} parent=1 // pred_check
      _
    $region47: #{tpu_custom_call.1} parent=1 // pred_check_branch
      %93 = sbr.rel (0) target = $region49
    $region48: #{tpu_custom_call.1} parent=1 // pred_region
      %94 = dma.done [#allocation6], 512
    $region49: #{tpu_custom_call.1} parent=1 // pred_fallthru
      _
    // Predicated region
    $region50: #{tpu_custom_call.1} parent=1 // pred_check
      _
    $region51: #{tpu_custom_call.1} parent=1 // pred_check_branch
      %96 = sbr.rel (0) target = $region53
    $region52: #{tpu_custom_call.1} parent=1 // pred_region
      %97 = dma.done [#allocation9], 512
    $region53: #{tpu_custom_call.1} parent=1 // pred_fallthru
      _
    // Predicated region
    $region54: #{tpu_custom_call.1} parent=1 // pred_check
      _
    $region55: #{tpu_custom_call.1} parent=1 // pred_check_branch
      %99 = sbr.rel (0) target = $region57
    $region56: #{tpu_custom_call.1} parent=1 // pred_region
      %100 = dma.done [#allocation9], 512
    $region57: #{tpu_custom_call.1} parent=1 // pred_fallthru
      _
    %v102 = vld [vmem:[#allocation2] sm:$0xf]
    %v103 = vld [vmem:[#allocation2 + $0x4] sm:$0xf]
    %v104 = vld [vmem:[#allocation5] sm:$0xf]
    %v105 = vld [vmem:[#allocation5 + $0x4] sm:$0xf]
    %v106 = vld [vmem:[#allocation5 + $0x8] sm:$0xf]
    %v107 = vld [vmem:[#allocation5 + $0xc] sm:$0xf]
    %v108 = vld [vmem:[%s2] sm:$0x1]
    %v110 = vlaneseq
    %v111 = vshrl.u32 %v110, 7
    %v112 = vsub.s32 0, %v111
    %v113 = vrot.slane %v108, %v112
    %v117 = vunpack.c.l.b16 %v102
    %v118 = vunpack.c.l.b16 %v103
    %v119 = vpack.c.b16 %v118, %v117
    %v124 = vunpack.c.l.b16 %v104
    %v125 = vunpack.c.l.b16 %v105
    %v126 = vunpack.c.l.b16 %v106
    %v127 = vunpack.c.l.b16 %v107
    %v128 = vpack.c.b16 %v125, %v124
    %v129 = vpack.c.b16 %v127, %v126
    %vm132 = vcmask 261120
    %v134 = vsel %vm132, %v119, 0
    %136 = vmatprep.subr.bf16.mxu0 0
    %137 = vmatpush1.bf16.msra.mxu0 %v128
    %138 = vmatprep.subr.bf16.mxu0 0
    %139 = vmatpush1.bf16.msra.mxu0 %v129
    %140 = vmatprep.subr.bf16.mxu0 0
    %141 = vmatpush1.bf16.msra.mxu0 0
    %142 = vmatprep.subr.bf16.mxu0 0
    %143 = vmatpush1.bf16.msra.mxu0 0
    %144 = vmatprep.subr.bf16.mxu0 0
    %145 = vmatpush1.bf16.msra.mxu0 0
    %146 = vmatprep.subr.bf16.mxu0 0
    %147 = vmatpush1.bf16.msra.mxu0 0
    %148 = vmatprep.subr.bf16.mxu0 0
    %149 = vmatpush1.bf16.msra.mxu0 0
    %150 = vmatprep.subr.bf16.mxu0 0
    %151 = vmatpush1.bf16.msra.mxu0 0
    %152 = vmatprep.subr.bf16.mxu0 0
    %153 = vmatpush1.bf16.msra.mxu0 0
    %154 = vmatprep.subr.bf16.mxu0 0
    %155 = vmatpush1.bf16.msra.mxu0 0
    %156 = vmatprep.subr.bf16.mxu0 0
    %157 = vmatpush1.bf16.msra.mxu0 0
    %158 = vmatprep.subr.bf16.mxu0 0
    %159 = vmatpush1.bf16.msra.mxu0 0
    %160 = vmatprep.subr.bf16.mxu0 0
    %161 = vmatpush1.bf16.msra.mxu0 0
    %162 = vmatprep.subr.bf16.mxu0 0
    %163 = vmatpush1.bf16.msra.mxu0 0
    %164 = vmatprep.subr.bf16.mxu0 0
    %165 = vmatpush1.bf16.msra.mxu0 0
    %166 = vmatprep.subr.bf16.mxu0 0
    %167 = vmatpush1.bf16.msra.mxu0 0
    %168 = vmatprep.mubr.bf16.mxu0 0
    %169 = vmatmul.mubr.bf16.gmra.mrb[0].mxu0 %v134
    %v170 = vpop.f32.mrb[0].mxu0
    %v171 = vadd.f32 %v113, %v170
    %v172 = vpop.f32.mrb[0].mxu0
    %v173 = vpop.f32.mrb[0].mxu0
    %v174 = vadd.f32 %v113, %v173
    %v175 = vpop.f32.mrb[0].mxu0
    %176 = vdwg.mxu0
    %v177 = vmax.f32 %v171, 0.0
    %v178 = vmax.f32 %v174, 0.0
    %v179 = vpack.c.bf16 %v178, %v177
    %v180 = vld [vmem:[#allocation7] sm:$0xf]
    %v181 = vld [vmem:[#allocation7 + $0x4] sm:$0xf]
    %v182 = vld [vmem:[#allocation7 + $0x8] sm:$0xf]
    %v183 = vld [vmem:[#allocation7 + $0xc] sm:$0xf]
    %v184 = vld [vmem:[#allocation7 + $0x10] sm:$0xf]
    %v185 = vld [vmem:[#allocation7 + $0x14] sm:$0xf]
    %v186 = vld [vmem:[#allocation7 + $0x18] sm:$0xf]
    %v187 = vld [vmem:[#allocation7 + $0x1c] sm:$0xf]
    %v188 = vld [vmem:[%s4] sm:$0x1]
    %v190 = vlaneseq
    %v191 = vshrl.u32 %v190, 7
    %v192 = vsub.s32 0, %v191
    %v193 = vrot.slane %v188, %v192
    %v203 = vunpack.c.l.b16 %v180
    %v204 = vunpack.c.l.b16 %v181
    %v205 = vunpack.c.l.b16 %v182
    %v206 = vunpack.c.l.b16 %v183
    %v207 = vunpack.c.l.b16 %v184
    %v208 = vunpack.c.l.b16 %v185
    %v209 = vunpack.c.l.b16 %v186
    %v210 = vunpack.c.l.b16 %v187
    %v211 = vpack.c.b16 %v204, %v203
    %v212 = vpack.c.b16 %v206, %v205
    %v213 = vpack.c.b16 %v208, %v207
    %v214 = vpack.c.b16 %v210, %v209
    %vm219 = vcmask 523264
    %v221 = vsel %vm219, %v179, 0
    %223 = vmatprep.subr.bf16.mxu0 0
    %224 = vmatpush1.bf16.msra.mxu0 %v211
    %225 = vmatprep.subr.bf16.mxu0 0
    %226 = vmatpush1.bf16.msra.mxu0 %v212
    %227 = vmatprep.subr.bf16.mxu0 0
    %228 = vmatpush1.bf16.msra.mxu0 %v213
    %229 = vmatprep.subr.bf16.mxu0 0
    %230 = vmatpush1.bf16.msra.mxu0 %v214
    %231 = vmatprep.subr.bf16.mxu0 0
    %232 = vmatpush1.bf16.msra.mxu0 0
    %233 = vmatprep.subr.bf16.mxu0 0
    %234 = vmatpush1.bf16.msra.mxu0 0
    %235 = vmatprep.subr.bf16.mxu0 0
    %236 = vmatpush1.bf16.msra.mxu0 0
    %237 = vmatprep.subr.bf16.mxu0 0
    %238 = vmatpush1.bf16.msra.mxu0 0
    %239 = vmatprep.subr.bf16.mxu0 0
    %240 = vmatpush1.bf16.msra.mxu0 0
    %241 = vmatprep.subr.bf16.mxu0 0
    %242 = vmatpush1.bf16.msra.mxu0 0
    %243 = vmatprep.subr.bf16.mxu0 0
    %244 = vmatpush1.bf16.msra.mxu0 0
    %245 = vmatprep.subr.bf16.mxu0 0
    %246 = vmatpush1.bf16.msra.mxu0 0
    %247 = vmatprep.subr.bf16.mxu0 0
    %248 = vmatpush1.bf16.msra.mxu0 0
    %249 = vmatprep.subr.bf16.mxu0 0
    %250 = vmatpush1.bf16.msra.mxu0 0
    %251 = vmatprep.subr.bf16.mxu0 0
    %252 = vmatpush1.bf16.msra.mxu0 0
    %253 = vmatprep.subr.bf16.mxu0 0
    %254 = vmatpush1.bf16.msra.mxu0 0
    %255 = vmatprep.mubr.bf16.mxu0 0
    %256 = vmatmul.mubr.bf16.gmra.mrb[0].mxu0 %v221
    %v257 = vpop.f32.mrb[0].mxu0
    %v258 = vadd.f32 %v193, %v257
    %v259 = vpop.f32.mrb[0].mxu0
    %v260 = vpop.f32.mrb[0].mxu0
    %v261 = vadd.f32 %v193, %v260
    %v262 = vpop.f32.mrb[0].mxu0
    %263 = vdwg.mxu0
    %v264 = vmax.f32 %v258, 0.0
    %v265 = vmax.f32 %v261, 0.0
    %v266 = vpack.c.bf16 %v265, %v264
    %v267 = vld [vmem:[#allocation8] sm:$0xf]
    %v268 = vld [vmem:[#allocation8 + $0x4] sm:$0xf]
    %v269 = vld [vmem:[#allocation8 + $0x8] sm:$0xf]
    %v270 = vld [vmem:[#allocation8 + $0xc] sm:$0xf]
    %v271 = vld [vmem:[#allocation8 + $0x10] sm:$0xf]
    %v272 = vld [vmem:[#allocation8 + $0x14] sm:$0xf]
    %v273 = vld [vmem:[#allocation8 + $0x18] sm:$0xf]
    %v274 = vld [vmem:[#allocation8 + $0x1c] sm:$0xf]
    %v275 = vld [vmem:[%s6] sm:$0x1]
    %v277 = vlaneseq
    %v278 = vshrl.u32 %v277, 7
    %v279 = vsub.s32 0, %v278
    %v280 = vrot.slane %v275, %v279
    %v290 = vunpack.c.l.b16 %v267
    %v291 = vunpack.c.l.b16 %v268
    %v292 = vunpack.c.l.b16 %v269
    %v293 = vunpack.c.l.b16 %v270
    %v294 = vunpack.c.l.b16 %v271
    %v295 = vunpack.c.l.b16 %v272
    %v296 = vunpack.c.l.b16 %v273
    %v297 = vunpack.c.l.b16 %v274
    %v298 = vpack.c.b16 %v291, %v290
    %v299 = vpack.c.b16 %v293, %v292
    %v300 = vpack.c.b16 %v295, %v294
    %v301 = vpack.c.b16 %v297, %v296
    %v307 = vsel %vm219, %v266, 0
    %309 = vmatprep.subr.bf16.mxu0 0
    %310 = vmatpush1.bf16.msra.mxu0 %v298
    %311 = vmatprep.subr.bf16.mxu0 0
    %312 = vmatpush1.bf16.msra.mxu0 %v299
    %313 = vmatprep.subr.bf16.mxu0 0
    %314 = vmatpush1.bf16.msra.mxu0 %v300
    %315 = vmatprep.subr.bf16.mxu0 0
    %316 = vmatpush1.bf16.msra.mxu0 %v301
    %317 = vmatprep.subr.bf16.mxu0 0
    %318 = vmatpush1.bf16.msra.mxu0 0
    %319 = vmatprep.subr.bf16.mxu0 0
    %320 = vmatpush1.bf16.msra.mxu0 0
    %321 = vmatprep.subr.bf16.mxu0 0
    %322 = vmatpush1.bf16.msra.mxu0 0
    %323 = vmatprep.subr.bf16.mxu0 0
    %324 = vmatpush1.bf16.msra.mxu0 0
    %325 = vmatprep.subr.bf16.mxu0 0
    %326 = vmatpush1.bf16.msra.mxu0 0
    %327 = vmatprep.subr.bf16.mxu0 0
    %328 = vmatpush1.bf16.msra.mxu0 0
    %329 = vmatprep.subr.bf16.mxu0 0
    %330 = vmatpush1.bf16.msra.mxu0 0
    %331 = vmatprep.subr.bf16.mxu0 0
    %332 = vmatpush1.bf16.msra.mxu0 0
    %333 = vmatprep.subr.bf16.mxu0 0
    %334 = vmatpush1.bf16.msra.mxu0 0
    %335 = vmatprep.subr.bf16.mxu0 0
    %336 = vmatpush1.bf16.msra.mxu0 0
    %337 = vmatprep.subr.bf16.mxu0 0
    %338 = vmatpush1.bf16.msra.mxu0 0
    %339 = vmatprep.subr.bf16.mxu0 0
    %340 = vmatpush1.bf16.msra.mxu0 0
    %341 = vmatprep.mubr.bf16.mxu0 0
    %342 = vmatmul.mubr.bf16.gmra.mrb[0].mxu0 %v307
    %v343 = vpop.f32.mrb[0].mxu0
    %v344 = vadd.f32 %v280, %v343
    %v345 = vpop.f32.mrb[0].mxu0
    %v346 = vpop.f32.mrb[0].mxu0
    %v347 = vadd.f32 %v280, %v346
    %v348 = vpop.f32.mrb[0].mxu0
    %349 = vdwg.mxu0
    %v350 = vmax.f32 %v344, 0.0
    %v351 = vmax.f32 %v347, 0.0
    %v352 = vpack.c.bf16 %v351, %v350
    %v353 = vld [vmem:[#allocation10] sm:$0xf]
    %v354 = vld [vmem:[#allocation10 + $0x4] sm:$0xf]
    %v355 = vld [vmem:[#allocation10 + $0x8] sm:$0xf]
    %v356 = vld [vmem:[#allocation10 + $0xc] sm:$0xf]
    %v357 = vld [vmem:[#allocation10 + $0x10] sm:$0xf]
    %v358 = vld [vmem:[#allocation10 + $0x14] sm:$0xf]
    %v359 = vld [vmem:[#allocation10 + $0x18] sm:$0xf]
    %v360 = vld [vmem:[#allocation10 + $0x1c] sm:$0xf]
    %v361 = vld [vmem:[%s8] sm:$0x1]
    %v363 = vlaneseq
    %v364 = vshrl.u32 %v363, 7
    %v365 = vsub.s32 0, %v364
    %v366 = vrot.slane %v361, %v365
    %v376 = vunpack.c.l.b16 %v353
    %v377 = vunpack.c.l.b16 %v354
    %v378 = vunpack.c.l.b16 %v355
    %v379 = vunpack.c.l.b16 %v356
    %v380 = vunpack.c.l.b16 %v357
    %v381 = vunpack.c.l.b16 %v358
    %v382 = vunpack.c.l.b16 %v359
    %v383 = vunpack.c.l.b16 %v360
    %v384 = vpack.c.b16 %v377, %v376
    %v385 = vpack.c.b16 %v379, %v378
    %v386 = vpack.c.b16 %v381, %v380
    %v387 = vpack.c.b16 %v383, %v382
    %v393 = vsel %vm219, %v352, 0
    %395 = vmatprep.subr.bf16.mxu0 0
    %396 = vmatpush1.bf16.msra.mxu0 %v384
    %397 = vmatprep.subr.bf16.mxu0 0
    %398 = vmatpush1.bf16.msra.mxu0 %v385
    %399 = vmatprep.subr.bf16.mxu0 0
    %400 = vmatpush1.bf16.msra.mxu0 %v386
    %401 = vmatprep.subr.bf16.mxu0 0
    %402 = vmatpush1.bf16.msra.mxu0 %v387
    %403 = vmatprep.subr.bf16.mxu0 0
    %404 = vmatpush1.bf16.msra.mxu0 0
    %405 = vmatprep.subr.bf16.mxu0 0
    %406 = vmatpush1.bf16.msra.mxu0 0
    %407 = vmatprep.subr.bf16.mxu0 0
    %408 = vmatpush1.bf16.msra.mxu0 0
    %409 = vmatprep.subr.bf16.mxu0 0
    %410 = vmatpush1.bf16.msra.mxu0 0
    %411 = vmatprep.subr.bf16.mxu0 0
    %412 = vmatpush1.bf16.msra.mxu0 0
    %413 = vmatprep.subr.bf16.mxu0 0
    %414 = vmatpush1.bf16.msra.mxu0 0
    %415 = vmatprep.subr.bf16.mxu0 0
    %416 = vmatpush1.bf16.msra.mxu0 0
    %417 = vmatprep.subr.bf16.mxu0 0
    %418 = vmatpush1.bf16.msra.mxu0 0
    %419 = vmatprep.subr.bf16.mxu0 0
    %420 = vmatpush1.bf16.msra.mxu0 0
    %421 = vmatprep.subr.bf16.mxu0 0
    %422 = vmatpush1.bf16.msra.mxu0 0
    %423 = vmatprep.subr.bf16.mxu0 0
    %424 = vmatpush1.bf16.msra.mxu0 0
    %425 = vmatprep.subr.bf16.mxu0 0
    %426 = vmatpush1.bf16.msra.mxu0 0
    %427 = vmatprep.mubr.bf16.mxu0 0
    %428 = vmatmul.mubr.bf16.gmra.mrb[0].mxu0 %v393
    %v429 = vpop.f32.mrb[0].mxu0
    %v430 = vadd.f32 %v366, %v429
    %v431 = vpop.f32.mrb[0].mxu0
    %v432 = vpop.f32.mrb[0].mxu0
    %v433 = vadd.f32 %v366, %v432
    %v434 = vpop.f32.mrb[0].mxu0
    %435 = vdwg.mxu0
    %436 = vst [vmem:[#allocation11] sm:$0xff] %v430
    %437 = vst [vmem:[#allocation11 + $0x8] sm:$0xff] %v433
    // Predicated region
    $region58: #{tpu_custom_call.1} parent=1 // pred_check
      _
    $region59: #{tpu_custom_call.1} parent=1 // pred_check_branch
      %439 = sbr.rel (0) target = $region61
    $region60: #{tpu_custom_call.1} parent=1 // pred_region
      %s441 = ssub.s32 256, 256
      %442 = vsyncadd [#allocation4], %s441
      %s443 = sshll.u32 [#allocation11], 4
      %s444 = int_to_ptr.vmem [resolvable:$true] %s443
      %449 = dma.vmem_to_hbm [thread:$0]  %s444, 256, %s9, [#allocation4], 128, 128, 8
    $region61: #{tpu_custom_call.1} parent=1 // pred_fallthru
      _
    // Predicated region
    $region62: #{tpu_custom_call.1} parent=1 // pred_check
      _
    $region63: #{tpu_custom_call.1} parent=1 // pred_check_branch
      %451 = sbr.rel (0) target = $region65
    $region64: #{tpu_custom_call.1} parent=1 // pred_region
      %452 = dma.done [#allocation4], 256
    $region65: #{tpu_custom_call.1} parent=1 // pred_fallthru
      _
    %453 = vsyncpa [#allocation3], 1
    %454 = vsyncpa [#allocation6], 1
    %455 = vsyncpa [#allocation9], 1
    %456 = vsyncpa [#allocation4], 1

</llo_original>
